<compile_context>
chip_gen: v6e
topology: v6e:2x2x1
jax: 0.10.0
libtpu: 0.0.40
codegen_flags: <defaults>
</compile_context>

<pallas_src>
import functools

import jax
import jax.numpy as jnp
from jax import lax
from jax.experimental import pallas as pl
from jax.experimental.pallas import tpu as pltpu


def _supcon_kernel(a_ref, ct_ref, alab_ref, clab_ref, cnt_ref, loss_ref,
                   m_sc, l_sc, s_sc, *, inv_T_in_kernel, scale, TA, TN):
    i = pl.program_id(0)          # anchor-row tile
    j = pl.program_id(1)          # contrast-column tile (reduction axis)
    nN = pl.num_programs(1)

    @pl.when(j == 0)
    def _init():
        m_sc[...] = jnp.full_like(m_sc, -jnp.inf)
        l_sc[...] = jnp.zeros_like(l_sc)
        s_sc[...] = jnp.zeros_like(s_sc)

    a = a_ref[...]                      # [TA, D]
    ct = ct_ref[...]                    # [D, TN]  (1/T already folded for f32)
    dims = (((1,), (0,)), ((), ()))     # [TA,D] x [D,TN] -> MXU-native, no transpose
    sim = lax.dot_general(a, ct, dims, preferred_element_type=jnp.float32)
    if inv_T_in_kernel is not None:
        # sub-f32 inputs: scale the f32 result (closest to reference numerics)
        sim = sim * jnp.float32(inv_T_in_kernel)

    # positive-pair mask from labels (boolean broadcast compare), [TA, TN]
    pos = alab_ref[...] == clab_ref[...]

    # online log-sum-exp over the contrast axis
    m_prev = m_sc[...]
    m_new = jnp.maximum(m_prev, jnp.max(sim, axis=1, keepdims=True))
    alpha = jnp.exp(m_prev - m_new)

    # self-exclusion work only on tiles that actually touch the diagonal
    row0 = i * TA
    col0 = j * TN
    diag_here = jnp.logical_and(row0 < col0 + TN, col0 < row0 + TA)

    @pl.when(diag_here)
    def _with_diag():
        row = row0 + lax.broadcasted_iota(jnp.int32, (TA, TN), 0)
        col = col0 + lax.broadcasted_iota(jnp.int32, (TA, TN), 1)
        not_self = row != col
        p = jnp.where(not_self, jnp.exp(sim - m_new), 0.0)
        l_sc[...] = alpha * l_sc[...] + jnp.sum(p, axis=1, keepdims=True)
        s_sc[...] = s_sc[...] + jnp.sum(
            jnp.where(jnp.logical_and(pos, not_self), sim, 0.0),
            axis=1, keepdims=True)

    @pl.when(jnp.logical_not(diag_here))
    def _off_diag():
        p = jnp.exp(sim - m_new)
        l_sc[...] = alpha * l_sc[...] + jnp.sum(p, axis=1, keepdims=True)
        s_sc[...] = s_sc[...] + jnp.sum(jnp.where(pos, sim, 0.0),
                                        axis=1, keepdims=True)

    m_sc[...] = m_new

    @pl.when(j == nN - 1)
    def _finalize():
        # mean_log_prob_pos = S/C - m - log(l)
        # (rows with zero positives give NaN, matching the PyTorch reference)
        mean_lp = s_sc[...] / cnt_ref[...] - m_sc[...] - jnp.log(l_sc[...])
        loss_ref[...] = (-scale * mean_lp).astype(loss_ref.dtype)


def _tile_candidates(dim, candidates):
    cands = [c for c in candidates if c < dim and dim % c == 0]
    cands.append(dim)                       # full extent is always a legal block
    return sorted(set(cands), reverse=True)


def _select_tiles(A, N, D, itemsize):
    """Pick (TA, TN): maximize TA first (contrast is re-streamed A/TA times),
    then TN, under a VMEM budget that is safe for v7x (64 MiB/TC physical)."""
    budget = 48 * 1024 * 1024
    ta_cands = _tile_candidates(A, (1024, 512, 256, 128, 64, 32, 16, 8))
    tn_cands = _tile_candidates(N, (1024, 512, 256, 128))

    def vmem_bytes(ta, tn):
        anchor = 2 * ta * D * itemsize              # double-buffered anchor tile
        contrast = 2 * D * tn * itemsize            # double-buffered contrast tile
        small = 2 * (ta + tn) * 4 + 4 * ta * 4      # labels, counts, out
        scratch = 3 * ta * 4                        # m, l, S accumulators
        temps = 4 * ta * tn * 4                     # sim / exp / mask temporaries
        return anchor + contrast + small + scratch + temps

    for ta in ta_cands:                             # big TA first
        for tn in tn_cands:                         # then big TN
            if vmem_bytes(ta, tn) <= budget:
                return ta, tn, vmem_bytes(ta, tn)
    # TODO(synk): nothing fits the budget (huge D with indivisible A/N) --
    # fall back to the smallest candidates; a padding / BoundedSlice path
    # would be needed for a clean solution.
    ta, tn = ta_cands[-1], tn_cands[-1]
    return ta, tn, vmem_bytes(ta, tn)


def sup_con_loss(features, labels=None, mask=None, *, T=0.07,
                 contrast_mode='all', base_T=0.07):
    """JAX/Pallas port of SupConLoss.forward (contrast_mode 'all' or 'one')."""
    if features.ndim < 3:
        raise ValueError('`features` needs to be [bsz, n_views, ...]')
    if features.ndim > 3:
        features = features.reshape(features.shape[0], features.shape[1], -1)

    bsz, n_views, d = features.shape

    if labels is not None and mask is not None:
        raise ValueError('Cannot define both `labels` and `mask`')
    if mask is not None:
        # TODO(synk): arbitrary (possibly asymmetric) `mask` inputs are not expressible
        # with the label-based in-kernel mask; only the `labels` / SimCLR paths are supported.
        raise NotImplementedError('explicit `mask` not supported; pass `labels` instead')
    if labels is None:
        labels = jnp.arange(bsz, dtype=jnp.int32)        # eye(bsz) == all-distinct labels
    else:
        labels = jnp.asarray(labels).reshape(-1).astype(jnp.int32)
        if labels.shape[0] != bsz:
            raise ValueError('Num of labels does not match num of features')

    inv_T = 1.0 / float(T)

    # contrast_feature = cat(unbind(features, dim=1), dim=0) -> [N, D] (view-major)
    contrast = jnp.transpose(features, (1, 0, 2)).reshape(n_views * bsz, d)
    contrast_labels = jnp.tile(labels, n_views)          # label of contrast row j

    # MXU-native feed: contrast transposed once to [D, N]; fold 1/T for f32.
    if contrast.dtype == jnp.float32:
        contrast_T = (contrast * jnp.float32(inv_T)).T
        inv_T_in_kernel = None
    else:
        contrast_T = contrast.T
        inv_T_in_kernel = inv_T

    if contrast_mode == 'one':
        anchor = contrast[:bsz]                          # == features[:, 0]
        anchor_labels = contrast_labels[:bsz]
        anchor_count = 1
    elif contrast_mode == 'all':
        anchor = contrast
        anchor_labels = contrast_labels
        anchor_count = n_views
    else:
        raise ValueError('Unknown mode: {}'.format(contrast_mode))

    A = anchor_count * bsz
    N = n_views * bsz

    # positive counts are label-only -> compute once in the wrapper
    counts_batch = jnp.sum((labels[:, None] == labels[None, :]).astype(jnp.float32), axis=1)
    pos_counts = jnp.float32(n_views) * counts_batch - 1.0          # per batch sample
    counts = jnp.tile(pos_counts, anchor_count).reshape(A, 1)       # [A, 1] f32

    alab = anchor_labels.reshape(A, 1)     # column -> broadcasts over lanes
    clab = contrast_labels.reshape(1, N)   # row    -> broadcasts over sublanes

    itemsize = jnp.dtype(features.dtype).itemsize
    TA, TN, vmem_needed = _select_tiles(A, N, d, itemsize)
    vmem_limit = min(64 * 1024 * 1024, max(32 * 1024 * 1024, int(vmem_needed * 1.3)))

    kernel = functools.partial(_supcon_kernel,
                               inv_T_in_kernel=inv_T_in_kernel,
                               scale=float(T / base_T), TA=TA, TN=TN)

    loss_rows = pl.pallas_call(
        kernel,
        out_shape=jax.ShapeDtypeStruct((A, 1), jnp.float32),
        grid_spec=pltpu.PrefetchScalarGridSpec(
            num_scalar_prefetch=0,
            grid=(A // TA, N // TN),
            in_specs=[
                pl.BlockSpec((TA, d), lambda i, j: (i, 0)),     # anchor tile
                pl.BlockSpec((d, TN), lambda i, j: (0, j)),     # contrast^T tile
                pl.BlockSpec((TA, 1), lambda i, j: (i, 0)),     # anchor labels
                pl.BlockSpec((1, TN), lambda i, j: (0, j)),     # contrast labels
                pl.BlockSpec((TA, 1), lambda i, j: (i, 0)),     # positive counts
            ],
            out_specs=pl.BlockSpec((TA, 1), lambda i, j: (i, 0)),
            scratch_shapes=[
                pltpu.VMEM((TA, 1), jnp.float32),   # m: running row max
                pltpu.VMEM((TA, 1), jnp.float32),   # l: running denominator
                pltpu.VMEM((TA, 1), jnp.float32),   # S: sum(sim) over positives
            ],
        ),
        compiler_params=pltpu.CompilerParams(
            dimension_semantics=("parallel", "arbitrary"),
            vmem_limit_bytes=vmem_limit),
    )(anchor, contrast_T, alab, clab, counts)

    # loss.view(anchor_count, batch_size).mean() == mean over all A anchor rows
    return jnp.mean(loss_rows)


def _sup_con_loss_ref(features, labels, T, base_T, contrast_mode='all'):
    """Pure-JAX reference identical to the PyTorch module (labels path)."""
    bsz, n_views, d = features.shape
    mask = (labels[:, None] == labels[None, :]).astype(jnp.float32)
    contrast = jnp.transpose(features, (1, 0, 2)).reshape(n_views * bsz, d)
    if contrast_mode == 'one':
        anchor = features[:, 0]
        anchor_count = 1
    else:
        anchor = contrast
        anchor_count = n_views
    sim = (anchor @ contrast.T) / T
    logits = sim - jnp.max(sim, axis=1, keepdims=True)
    mask = jnp.tile(mask, (anchor_count, n_views))
    A, N = mask.shape
    logits_mask = 1.0 - jnp.eye(A, N, dtype=jnp.float32)
    mask = mask * logits_mask
    exp_logits = jnp.exp(logits) * logits_mask
    log_prob = logits - jnp.log(exp_logits.sum(1, keepdims=True))
    mean_log_prob_pos = (mask * log_prob).sum(1) / mask.sum(1)
    loss = -(T / base_T) * mean_log_prob_pos
    return loss.mean()


if __name__ == "__main__":
    key = jax.random.PRNGKey(0)
    k1, _ = jax.random.split(key)

    bsz, n_views, d = 4, 2, 32
    feats = jax.random.normal(k1, (bsz, n_views, d), dtype=jnp.float32)
    # L2-normalize features (as typically fed to SupConLoss)
    feats = feats / jnp.linalg.norm(feats, axis=-1, keepdims=True)
    labels = jnp.array([0, 1, 0, 1], dtype=jnp.int32)

    ok = True
    for mode in ('all', 'one'):
        loss = sup_con_loss(feats, labels=labels, T=0.07, base_T=0.07,
                            contrast_mode=mode)
        loss = jax.block_until_ready(loss)
        ref = _sup_con_loss_ref(feats, labels, 0.07, 0.07, mode)
        if not jnp.allclose(loss, ref, atol=1e-5, rtol=1e-5):
            ok = False
            print("MISMATCH", mode, loss, ref)

    assert ok
    print("KERNEL_OK")
</pallas_src>

<mosaic_0001>
module attributes {stable_mosaic.version = 11 : i64} {
  func.func @_supcon_kernel(%arg0: i32, %arg1: i32, %arg2: memref<8x32xf32, #tpu.memory_space<vmem>>, %arg3: memref<32x8xf32, #tpu.memory_space<vmem>>, %arg4: memref<8x1xi32, #tpu.memory_space<vmem>>, %arg5: memref<1x8xi32, #tpu.memory_space<vmem>>, %arg6: memref<8x1xf32, #tpu.memory_space<vmem>>, %arg7: memref<8x1xf32, #tpu.memory_space<vmem>>, %arg8: memref<8x1xf32, #tpu.memory_space<vmem>>, %arg9: memref<8x1xf32, #tpu.memory_space<vmem>>, %arg10: memref<8x1xf32, #tpu.memory_space<vmem>>) attributes {dimension_semantics = [#tpu.dimension_semantics<parallel>, #tpu.dimension_semantics<arbitrary>], iteration_bounds = array<i64: 1, 1>, scalar_prefetch = 0 : i64, scratch_operands = 3 : i64, tpu.core_type = #tpu.core_type<tc>, window_params = [{transform_indices = @transform_0, window_bounds = array<i64: 8, 32>}, {transform_indices = @transform_1, window_bounds = array<i64: 32, 8>}, {transform_indices = @transform_2, window_bounds = array<i64: 8, 1>}, {transform_indices = @transform_3, window_bounds = array<i64: 1, 8>}, {transform_indices = @transform_4, window_bounds = array<i64: 8, 1>}, {transform_indices = @transform_5, window_bounds = array<i64: 8, 1>}]} {
    %c0_i32 = arith.constant 0 : i32
    %0 = arith.cmpi eq, %arg1, %c0_i32 : i32
    %1 = arith.extui %0 : i1 to i32
    %c0_i32_0 = arith.constant 0 : i32
    %2 = arith.cmpi ne, %1, %c0_i32_0 : i32
    scf.if %2 {
      %cst_20 = arith.constant 0xFF800000 : f32
      %33 = vector.broadcast %cst_20 : f32 to vector<8x1xf32>
      %c0_21 = arith.constant 0 : index
      %c0_22 = arith.constant 0 : index
      %34 = vector.load %arg8[%c0_21, %c0_22] : memref<8x1xf32, #tpu.memory_space<vmem>>, vector<8x1xf32>
      tpu.vector_store %arg8[%c0_21, %c0_22], %33 {strides = array<i32>} : memref<8x1xf32, #tpu.memory_space<vmem>>, vector<8x1xf32>,
      %cst_23 = arith.constant 0.000000e+00 : f32
      %35 = vector.broadcast %cst_23 : f32 to vector<8x1xf32>
      %c0_24 = arith.constant 0 : index
      %c0_25 = arith.constant 0 : index
      %36 = vector.load %arg9[%c0_24, %c0_25] : memref<8x1xf32, #tpu.memory_space<vmem>>, vector<8x1xf32>
      tpu.vector_store %arg9[%c0_24, %c0_25], %35 {strides = array<i32>} : memref<8x1xf32, #tpu.memory_space<vmem>>, vector<8x1xf32>,
      %cst_26 = arith.constant 0.000000e+00 : f32
      %37 = vector.broadcast %cst_26 : f32 to vector<8x1xf32>
      %c0_27 = arith.constant 0 : index
      %c0_28 = arith.constant 0 : index
      %38 = vector.load %arg10[%c0_27, %c0_28] : memref<8x1xf32, #tpu.memory_space<vmem>>, vector<8x1xf32>
      tpu.vector_store %arg10[%c0_27, %c0_28], %37 {strides = array<i32>} : memref<8x1xf32, #tpu.memory_space<vmem>>, vector<8x1xf32>,
    } else {
    }
    %c0 = arith.constant 0 : index
    %c0_1 = arith.constant 0 : index
    %3 = vector.load %arg2[%c0, %c0_1] : memref<8x32xf32, #tpu.memory_space<vmem>>, vector<8x32xf32>
    %c0_2 = arith.constant 0 : index
    %c0_3 = arith.constant 0 : index
    %4 = vector.load %arg3[%c0_2, %c0_3] : memref<32x8xf32, #tpu.memory_space<vmem>>, vector<32x8xf32>
    %cst = arith.constant dense<0.000000e+00> : vector<8x8xf32>
    %5 = tpu.matmul %3, %4, %cst {dimension_numbers = #tpu.dot_dimension_numbers<[1], [0], [0], [1], [0, 0, 1, 1], [], []>} : vector<8x32xf32>, vector<32x8xf32>, vector<8x8xf32> -> vector<8x8xf32>
    %c0_4 = arith.constant 0 : index
    %c0_5 = arith.constant 0 : index
    %6 = vector.load %arg4[%c0_4, %c0_5] : memref<8x1xi32, #tpu.memory_space<vmem>>, vector<8x1xi32>
    %c0_6 = arith.constant 0 : index
    %c0_7 = arith.constant 0 : index
    %7 = vector.load %arg5[%c0_6, %c0_7] : memref<1x8xi32, #tpu.memory_space<vmem>>, vector<1x8xi32>
    %8 = vector.broadcast %6 : vector<8x1xi32> to vector<8x8xi32>
    %9 = vector.broadcast %7 : vector<1x8xi32> to vector<8x8xi32>
    %10 = arith.cmpi eq, %8, %9 : vector<8x8xi32>
    %c0_8 = arith.constant 0 : index
    %c0_9 = arith.constant 0 : index
    %11 = vector.load %arg8[%c0_8, %c0_9] : memref<8x1xf32, #tpu.memory_space<vmem>>, vector<8x1xf32>
    %cst_10 = arith.constant dense<0xFF800000> : vector<8xf32>
    %12 = vector.multi_reduction <maximumf>, %5, %cst_10 [1] : vector<8x8xf32> to vector<8xf32>
    %13 = vector.shape_cast %12 : vector<8xf32> to vector<8x1xf32>
    %14 = arith.maximumf %11, %13 : vector<8x1xf32>
    %15 = arith.subf %11, %14 : vector<8x1xf32>
    %16 = math.exp %15 : vector<8x1xf32>
    %c8_i32 = arith.constant 8 : i32
    %17 = arith.muli %arg0, %c8_i32 : i32
    %c8_i32_11 = arith.constant 8 : i32
    %18 = arith.muli %arg1, %c8_i32_11 : i32
    %c8_i32_12 = arith.constant 8 : i32
    %19 = arith.addi %18, %c8_i32_12 : i32
    %20 = arith.cmpi slt, %17, %19 : i32
    %c8_i32_13 = arith.constant 8 : i32
    %21 = arith.addi %17, %c8_i32_13 : i32
    %22 = arith.cmpi slt, %18, %21 : i32
    %23 = arith.andi %20, %22 : i1
    %24 = arith.extui %23 : i1 to i32
    %c0_i32_14 = arith.constant 0 : i32
    %25 = arith.cmpi ne, %24, %c0_i32_14 : i32
    scf.if %25 {
      %33 = tpu.iota {dimensions = array<i32: 0>} : vector<8x8xi32>
      %34 = vector.broadcast %17 : i32 to vector<8x8xi32>
      %35 = arith.addi %34, %33 : vector<8x8xi32>
      %36 = tpu.iota {dimensions = array<i32: 1>} : vector<8x8xi32>
      %37 = vector.broadcast %18 : i32 to vector<8x8xi32>
      %38 = arith.addi %37, %36 : vector<8x8xi32>
      %39 = arith.cmpi ne, %35, %38 : vector<8x8xi32>
      %40 = vector.broadcast %14 : vector<8x1xf32> to vector<8x8xf32>
      %41 = arith.subf %5, %40 : vector<8x8xf32>
      %42 = math.exp %41 : vector<8x8xf32>
      %cst_20 = arith.constant 0.000000e+00 : f32
      %43 = vector.broadcast %cst_20 : f32 to vector<8x8xf32>
      %44 = arith.select %39, %42, %43 : vector<8x8xi1>, vector<8x8xf32>
      %c0_21 = arith.constant 0 : index
      %c0_22 = arith.constant 0 : index
      %45 = vector.load %arg9[%c0_21, %c0_22] : memref<8x1xf32, #tpu.memory_space<vmem>>, vector<8x1xf32>
      %46 = arith.mulf %16, %45 : vector<8x1xf32>
      %cst_23 = arith.constant dense<0.000000e+00> : vector<8xf32>
      %47 = vector.multi_reduction <add>, %44, %cst_23 [1] : vector<8x8xf32> to vector<8xf32>
      %48 = vector.shape_cast %47 : vector<8xf32> to vector<8x1xf32>
      %49 = arith.addf %46, %48 : vector<8x1xf32>
      %c0_24 = arith.constant 0 : index
      %c0_25 = arith.constant 0 : index
      %50 = vector.load %arg9[%c0_24, %c0_25] : memref<8x1xf32, #tpu.memory_space<vmem>>, vector<8x1xf32>
      tpu.vector_store %arg9[%c0_24, %c0_25], %49 {strides = array<i32>} : memref<8x1xf32, #tpu.memory_space<vmem>>, vector<8x1xf32>,
      %c0_26 = arith.constant 0 : index
      %c0_27 = arith.constant 0 : index
      %51 = vector.load %arg10[%c0_26, %c0_27] : memref<8x1xf32, #tpu.memory_space<vmem>>, vector<8x1xf32>
      %52 = arith.andi %10, %39 : vector<8x8xi1>
      %cst_28 = arith.constant 0.000000e+00 : f32
      %53 = vector.broadcast %cst_28 : f32 to vector<8x8xf32>
      %54 = arith.select %52, %5, %53 : vector<8x8xi1>, vector<8x8xf32>
      %cst_29 = arith.constant dense<0.000000e+00> : vector<8xf32>
      %55 = vector.multi_reduction <add>, %54, %cst_29 [1] : vector<8x8xf32> to vector<8xf32>
      %56 = vector.shape_cast %55 : vector<8xf32> to vector<8x1xf32>
      %57 = arith.addf %51, %56 : vector<8x1xf32>
      %c0_30 = arith.constant 0 : index
      %c0_31 = arith.constant 0 : index
      %58 = vector.load %arg10[%c0_30, %c0_31] : memref<8x1xf32, #tpu.memory_space<vmem>>, vector<8x1xf32>
      tpu.vector_store %arg10[%c0_30, %c0_31], %57 {strides = array<i32>} : memref<8x1xf32, #tpu.memory_space<vmem>>, vector<8x1xf32>,
    } else {
    }
    %true = arith.constant true
    %26 = arith.xori %23, %true : i1
    %27 = arith.extui %26 : i1 to i32
    %c0_i32_15 = arith.constant 0 : i32
    %28 = arith.cmpi ne, %27, %c0_i32_15 : i32
    scf.if %28 {
      %33 = vector.broadcast %14 : vector<8x1xf32> to vector<8x8xf32>
      %34 = arith.subf %5, %33 : vector<8x8xf32>
      %35 = math.exp %34 : vector<8x8xf32>
      %c0_20 = arith.constant 0 : index
      %c0_21 = arith.constant 0 : index
      %36 = vector.load %arg9[%c0_20, %c0_21] : memref<8x1xf32, #tpu.memory_space<vmem>>, vector<8x1xf32>
      %37 = arith.mulf %16, %36 : vector<8x1xf32>
      %cst_22 = arith.constant dense<0.000000e+00> : vector<8xf32>
      %38 = vector.multi_reduction <add>, %35, %cst_22 [1] : vector<8x8xf32> to vector<8xf32>
      %39 = vector.shape_cast %38 : vector<8xf32> to vector<8x1xf32>
      %40 = arith.addf %37, %39 : vector<8x1xf32>
      %c0_23 = arith.constant 0 : index
      %c0_24 = arith.constant 0 : index
      %41 = vector.load %arg9[%c0_23, %c0_24] : memref<8x1xf32, #tpu.memory_space<vmem>>, vector<8x1xf32>
      tpu.vector_store %arg9[%c0_23, %c0_24], %40 {strides = array<i32>} : memref<8x1xf32, #tpu.memory_space<vmem>>, vector<8x1xf32>,
      %c0_25 = arith.constant 0 : index
      %c0_26 = arith.constant 0 : index
      %42 = vector.load %arg10[%c0_25, %c0_26] : memref<8x1xf32, #tpu.memory_space<vmem>>, vector<8x1xf32>
      %cst_27 = arith.constant 0.000000e+00 : f32
      %43 = vector.broadcast %cst_27 : f32 to vector<8x8xf32>
      %44 = arith.select %10, %5, %43 : vector<8x8xi1>, vector<8x8xf32>
      %cst_28 = arith.constant dense<0.000000e+00> : vector<8xf32>
      %45 = vector.multi_reduction <add>, %44, %cst_28 [1] : vector<8x8xf32> to vector<8xf32>
      %46 = vector.shape_cast %45 : vector<8xf32> to vector<8x1xf32>
      %47 = arith.addf %42, %46 : vector<8x1xf32>
      %c0_29 = arith.constant 0 : index
      %c0_30 = arith.constant 0 : index
      %48 = vector.load %arg10[%c0_29, %c0_30] : memref<8x1xf32, #tpu.memory_space<vmem>>, vector<8x1xf32>
      tpu.vector_store %arg10[%c0_29, %c0_30], %47 {strides = array<i32>} : memref<8x1xf32, #tpu.memory_space<vmem>>, vector<8x1xf32>,
    } else {
    }
    %c0_16 = arith.constant 0 : index
    %c0_17 = arith.constant 0 : index
    %29 = vector.load %arg8[%c0_16, %c0_17] : memref<8x1xf32, #tpu.memory_space<vmem>>, vector<8x1xf32>
    tpu.vector_store %arg8[%c0_16, %c0_17], %14 {strides = array<i32>} : memref<8x1xf32, #tpu.memory_space<vmem>>, vector<8x1xf32>,
    %c0_i32_18 = arith.constant 0 : i32
    %30 = arith.cmpi eq, %arg1, %c0_i32_18 : i32
    %31 = arith.extui %30 : i1 to i32
    %c0_i32_19 = arith.constant 0 : i32
    %32 = arith.cmpi ne, %31, %c0_i32_19 : i32
    scf.if %32 {
      %c0_20 = arith.constant 0 : index
      %c0_21 = arith.constant 0 : index
      %33 = vector.load %arg10[%c0_20, %c0_21] : memref<8x1xf32, #tpu.memory_space<vmem>>, vector<8x1xf32>
      %c0_22 = arith.constant 0 : index
      %c0_23 = arith.constant 0 : index
      %34 = vector.load %arg6[%c0_22, %c0_23] : memref<8x1xf32, #tpu.memory_space<vmem>>, vector<8x1xf32>
      %35 = arith.divf %33, %34 : vector<8x1xf32>
      %c0_24 = arith.constant 0 : index
      %c0_25 = arith.constant 0 : index
      %36 = vector.load %arg8[%c0_24, %c0_25] : memref<8x1xf32, #tpu.memory_space<vmem>>, vector<8x1xf32>
      %37 = arith.subf %35, %36 : vector<8x1xf32>
      %c0_26 = arith.constant 0 : index
      %c0_27 = arith.constant 0 : index
      %38 = vector.load %arg9[%c0_26, %c0_27] : memref<8x1xf32, #tpu.memory_space<vmem>>, vector<8x1xf32>
      %39 = math.log %38 : vector<8x1xf32>
      %40 = arith.subf %37, %39 : vector<8x1xf32>
      %cst_28 = arith.constant -1.000000e+00 : f32
      %41 = vector.broadcast %cst_28 : f32 to vector<8x1xf32>
      %42 = arith.mulf %41, %40 : vector<8x1xf32>
      %c0_29 = arith.constant 0 : index
      %c0_30 = arith.constant 0 : index
      %43 = vector.load %arg7[%c0_29, %c0_30] : memref<8x1xf32, #tpu.memory_space<vmem>>, vector<8x1xf32>
      tpu.vector_store %arg7[%c0_29, %c0_30], %42 {strides = array<i32>} : memref<8x1xf32, #tpu.memory_space<vmem>>, vector<8x1xf32>,
    } else {
    }
    return
  }
  func.func @transform_0(%arg0: i32, %arg1: i32) -> (i32, i32) {
    %c0_i32 = arith.constant 0 : i32
    %c0_i32_0 = arith.constant 0 : i32
    return %arg0, %c0_i32 : i32, i32
  }
  func.func @transform_1(%arg0: i32, %arg1: i32) -> (i32, i32) {
    %c0_i32 = arith.constant 0 : i32
    %c0_i32_0 = arith.constant 0 : i32
    return %c0_i32, %arg1 : i32, i32
  }
  func.func @transform_2(%arg0: i32, %arg1: i32) -> (i32, i32) {
    %c0_i32 = arith.constant 0 : i32
    %c0_i32_0 = arith.constant 0 : i32
    return %arg0, %c0_i32 : i32, i32
  }
  func.func @transform_3(%arg0: i32, %arg1: i32) -> (i32, i32) {
    %c0_i32 = arith.constant 0 : i32
    %c0_i32_0 = arith.constant 0 : i32
    return %c0_i32, %arg1 : i32, i32
  }
  func.func @transform_4(%arg0: i32, %arg1: i32) -> (i32, i32) {
    %c0_i32 = arith.constant 0 : i32
    %c0_i32_0 = arith.constant 0 : i32
    return %arg0, %c0_i32 : i32, i32
  }
  func.func @transform_5(%arg0: i32, %arg1: i32) -> (i32, i32) {
    %c0_i32 = arith.constant 0 : i32
    %c0_i32_0 = arith.constant 0 : i32
    return %arg0, %c0_i32 : i32, i32
  }
}

</mosaic_0001>

<llo_original>
// kernel: tpu_custom_call.1
$region0: #{tpu_custom_call.1}
  #allocation0 [shape = 'u32[]', space=smem, size = 0x4, offset = 0x4, fixed_abs, tag = 'smem constant byte address 0x4 - core index']
  #allocation1 [shape = 'u32[144,128]{1,0:T(1,128)}', space=vmem, size = 0x12000, scoped, tag = 'internal scratch']
  #allocation2 [shape = 'f32[8,1]{1,0:T(8,128)}', space=vmem, size = 0x1000, scoped, tag = 'scratch operand']
  #allocation3 [shape = 'f32[8,1]{1,0:T(8,128)}', space=vmem, size = 0x1000, scoped, tag = 'scratch operand']
  #allocation4 [shape = 'f32[8,1]{1,0:T(8,128)}', space=vmem, size = 0x1000, scoped, tag = 'scratch operand']
  %s0 = inlined_call_operand.vmem [shape: f32[8,32], index: 0, kind: input, shape index: {}]
  %s1 = inlined_call_operand.vmem [shape: f32[32,8], index: 1, kind: input, shape index: {}]
  %s2 = inlined_call_operand.vmem [shape: s32[8,1], index: 2, kind: input, shape index: {}]
  %s3 = inlined_call_operand.vmem [shape: s32[1,8], index: 3, kind: input, shape index: {}]
  %s4 = inlined_call_operand.vmem [shape: f32[8,1], index: 4, kind: input, shape index: {}]
  %s5 = inlined_call_operand.vmem [shape: f32[8,1], index: 5, kind: output, shape index: {}]
  %s6 = sld [smem:[#allocation0]]
  $region46: #{tpu_custom_call.1} parent=0
    _
  %s8 = ssub.s32 1, %s6
  %s9 = scalar_select 0, %s8, %s6
  // Predicated region
  $region2: #{tpu_custom_call.1} parent=0 // pred_check
    _
  $region3: #{tpu_custom_call.1} parent=0 // pred_check_branch
    %11 = sbr.rel (0) target = $region5
  $region4: #{tpu_custom_call.1} parent=0 // pred_region
    _
  $region5: #{tpu_custom_call.1} parent=0 // pred_fallthru
    _
  // Predicated region
  $region6: #{tpu_custom_call.1} parent=0 // pred_check
    _
  $region7: #{tpu_custom_call.1} parent=0 // pred_check_branch
    %13 = sbr.rel (0) target = $region9
  $region8: #{tpu_custom_call.1} parent=0 // pred_region
    _
  $region9: #{tpu_custom_call.1} parent=0 // pred_fallthru
    _
  // Predicated region
  $region10: #{tpu_custom_call.1} parent=0 // pred_check
    _
  $region11: #{tpu_custom_call.1} parent=0 // pred_check_branch
    %15 = sbr.rel (0) target = $region13
  $region12: #{tpu_custom_call.1} parent=0 // pred_region
    _
  $region13: #{tpu_custom_call.1} parent=0 // pred_fallthru
    _
  // Predicated region
  $region14: #{tpu_custom_call.1} parent=0 // pred_check
    _
  $region15: #{tpu_custom_call.1} parent=0 // pred_check_branch
    %17 = sbr.rel (0) target = $region17
  $region16: #{tpu_custom_call.1} parent=0 // pred_region
    _
  $region17: #{tpu_custom_call.1} parent=0 // pred_fallthru
    _
  // Predicated region
  $region18: #{tpu_custom_call.1} parent=0 // pred_check
    _
  $region19: #{tpu_custom_call.1} parent=0 // pred_check_branch
    %19 = sbr.rel (0) target = $region21
  $region20: #{tpu_custom_call.1} parent=0 // pred_region
    _
  $region21: #{tpu_custom_call.1} parent=0 // pred_fallthru
    _
  %p20 = scmp.eq.s32.totalorder 0, 0
  // Predicated region
  $region22: #{tpu_custom_call.1} parent=0 // pred_check
    %p21 = pneg %p20
  $region23: #{tpu_custom_call.1} parent=0 // pred_check_branch
    %23 = sbr.rel (%p21) target = $region25
  $region24: #{tpu_custom_call.1} parent=0 // pred_region
    %vm24 = vcmask 7168
    %25 = vst.msk [vmem:[#allocation2] sm:$0xff] %vm24, -inf
    %26 = vst.msk [vmem:[#allocation3] sm:$0xff] %vm24, 0.0
    %27 = vst.msk [vmem:[#allocation4] sm:$0xff] %vm24, 0.0
  $region25: #{tpu_custom_call.1} parent=0 // pred_fallthru
    _
  %v28 = vld [vmem:[%s0] sm:$0xff]
  %v29 = vld [vmem:[%s1] sm:$0xff]
  %v30 = vld [vmem:[%s1 + $0x8] sm:$0xff]
  %v31 = vld [vmem:[%s1 + $0x10] sm:$0xff]
  %v32 = vld [vmem:[%s1 + $0x18] sm:$0xff]
  %vm33 = vcmask 261120
  %v35 = vsel %vm33, %v28, 0
  %37 = vmatprep.subr.mxu0 0.0
  %38 = vmatpush1.msra.mxu0 0.0
  %39 = vmatprep.subr.mxu0 0.0
  %40 = vmatpush1.msra.mxu0 0.0
  %41 = vmatprep.subr.mxu0 0.0
  %42 = vmatpush1.msra.mxu0 0.0
  %43 = vmatprep.subr.mxu0 0.0
  %44 = vmatpush1.msra.mxu0 0.0
  %45 = vmatprep.subr.mxu0 0.0
  %46 = vmatpush1.msra.mxu0 0.0
  %47 = vmatprep.subr.mxu0 0.0
  %48 = vmatpush1.msra.mxu0 0.0
  %49 = vmatprep.subr.mxu0 0.0
  %50 = vmatpush1.msra.mxu0 0.0
  %51 = vmatprep.subr.mxu0 0.0
  %52 = vmatpush1.msra.mxu0 0.0
  %53 = vmatprep.subr.mxu0 0.0
  %54 = vmatpush1.msra.mxu0 0.0
  %55 = vmatprep.subr.mxu0 0.0
  %56 = vmatpush1.msra.mxu0 0.0
  %57 = vmatprep.subr.mxu0 0.0
  %58 = vmatpush1.msra.mxu0 0.0
  %59 = vmatprep.subr.mxu0 0.0
  %60 = vmatpush1.msra.mxu0 0.0
  %61 = vmatprep.subr.mxu0 0.0
  %62 = vmatpush1.msra.mxu0 %v32
  %63 = vmatprep.subr.mxu0 0.0
  %64 = vmatpush1.msra.mxu0 %v31
  %65 = vmatprep.subr.mxu0 0.0
  %66 = vmatpush1.msra.mxu0 %v30
  %67 = vmatprep.subr.mxu0 0.0
  %68 = vmatpush1.msra.mxu0 %v29
  %69 = vmatprep.subr.mxu0 0.0
  %70 = vmatpush2.msra.mxu0 0.0
  %71 = vmatprep.subr.mxu0 0.0
  %72 = vmatpush2.msra.mxu0 0.0
  %73 = vmatprep.subr.mxu0 0.0
  %74 = vmatpush2.msra.mxu0 0.0
  %75 = vmatprep.subr.mxu0 0.0
  %76 = vmatpush2.msra.mxu0 0.0
  %77 = vmatprep.subr.mxu0 0.0
  %78 = vmatpush2.msra.mxu0 0.0
  %79 = vmatprep.subr.mxu0 0.0
  %80 = vmatpush2.msra.mxu0 0.0
  %81 = vmatprep.subr.mxu0 0.0
  %82 = vmatpush2.msra.mxu0 0.0
  %83 = vmatprep.subr.mxu0 0.0
  %84 = vmatpush2.msra.mxu0 0.0
  %85 = vmatprep.subr.mxu0 0.0
  %86 = vmatpush2.msra.mxu0 0.0
  %87 = vmatprep.subr.mxu0 0.0
  %88 = vmatpush2.msra.mxu0 0.0
  %89 = vmatprep.subr.mxu0 0.0
  %90 = vmatpush2.msra.mxu0 0.0
  %91 = vmatprep.subr.mxu0 0.0
  %92 = vmatpush2.msra.mxu0 0.0
  %93 = vmatprep.subr.mxu0 0.0
  %94 = vmatpush2.msra.mxu0 0.0
  %95 = vmatprep.subr.mxu0 0.0
  %96 = vmatpush2.msra.mxu0 0.0
  %97 = vmatprep.subr.mxu0 0.0
  %98 = vmatpush2.msra.mxu0 0.0
  %99 = vmatprep.subr.mxu0 0.0
  %100 = vmatpush2.msra.mxu0 0.0
  %101 = vmatprep.mubr.f32.mxu0 0.0
  %102 = vmatmul.mubr.f32.gmra.mxu0 %v35
  %v103 = vpop.f32.mrf.mxu0
  %v104 = vadd.f32 0.0, %v103
  %v105 = vpop.f32.mrf.mxu0
  %106 = vdwg.mxu0
  %v107 = vld [vmem:[%s2] sm:$0xff]
  %v108 = vld [vmem:[%s3] sm:$0x1]
  %109 = vset.pattern.permute.xlu0 0
  %110 = vperm.xlu0 %109, %v107
  %v111 = vpop.permute.xlu0 %110
  %v112 = vlaneseq
  %v113 = vshrl.u32 %v112, 7
  %v114 = vsub.s32 0, %v113
  %v115 = vrot.slane %v108, %v114
  %vm116 = vcmp.eq.s32.totalorder %v111, %v115
  %v117 = vld [vmem:[#allocation2] sm:$0xff]
  %vm118 = vcmask 64512
  %v119 = vsel %vm118, %v104, -inf
  %120 = vmax.xlane.f32.xlu0 %v119
  %v121 = vpop.xlane.xlu0 %120
  %v122 = vmax.f32 %v117, %v121
  %v123 = vsub.f32 %v117, %v122
  %v124 = vmul.f32 %v123, 1.442695
  %v125 = vpow.pop %v124
  %s126 = smul.u32 0, 8
  %s127 = smul.u32 0, 8
  %s128 = sadd.s32 %s127, 8
  %p129 = scmp.lt.s32.totalorder %s126, %s128
  %s130 = sadd.s32 %s126, 8
  %p131 = scmp.lt.s32.totalorder %s127, %s130
  %p132 = pnand %p129, %p131
  %p133 = pneg %p132
  // Predicated region
  $region26: #{tpu_custom_call.1} parent=0 // pred_check
    _
  $region27: #{tpu_custom_call.1} parent=0 // pred_check_branch
    %135 = sbr.rel (%p132) target = $region29
  $region28: #{tpu_custom_call.1} parent=0 // pred_region
    %v136 = vlaneseq
    %v137 = vshrl.u32 %v136, 7
    %v138 = vstv %s126
    %v139 = vadd.s32 %v138, %v137
    %v140 = vlaneseq
    %v141 = vand.u32 %v140, 127
    %v142 = vstv %s127
    %v143 = vadd.s32 %v142, %v141
    %vm144 = vcmp.ne.s32.totalorder %v139, %v143
    %146 = vset.pattern.permute.xlu0 0
    %147 = vperm.xlu0 %146, %v122
    %v148 = vpop.permute.xlu0 %147
    %v150 = vsub.f32 %v104, %v148
    %v151 = vmul.f32 %v150, 1.442695
    %v152 = vpow.pop %v151
    %v153 = vsel %vm144, %v152, 0.0
    %v154 = vld [vmem:[#allocation3] sm:$0xff]
    %v155 = vmul.f32 %v125, %v154
    %v156 = vsel %vm118, %v153, 0.0
    %157 = vadd.xlane.f32.xlu0 %v156
    %v158 = vpop.xlane.xlu0 %157
    %v159 = vadd.f32 %v155, %v158
    %vm160 = vcmask 7168
    %161 = vst.msk [vmem:[#allocation3] sm:$0xff] %vm160, %v159
    %v162 = vld [vmem:[#allocation4] sm:$0xff]
    %vm163 = vmand %vm116, %vm144
    %v164 = vsel %vm163, %v104, 0.0
    %v165 = vsel %vm118, %v164, 0.0
    %166 = vadd.xlane.f32.xlu0 %v165
    %v167 = vpop.xlane.xlu0 %166
    %v168 = vadd.f32 %v162, %v167
    %169 = vst.msk [vmem:[#allocation4] sm:$0xff] %vm160, %v168
  $region29: #{tpu_custom_call.1} parent=0 // pred_fallthru
    _
  %p170 = pneg %p133
  // Predicated region
  $region30: #{tpu_custom_call.1} parent=0 // pred_check
    _
  $region31: #{tpu_custom_call.1} parent=0 // pred_check_branch
    %172 = sbr.rel (%p133) target = $region33
  $region32: #{tpu_custom_call.1} parent=0 // pred_region
    %174 = vset.pattern.permute.xlu0 0
    %175 = vperm.xlu0 %174, %v122
    %v176 = vpop.permute.xlu0 %175
    %v178 = vsub.f32 %v104, %v176
    %v179 = vmul.f32 %v178, 1.442695
    %v180 = vpow.pop %v179
    %v181 = vld [vmem:[#allocation3] sm:$0xff]
    %v182 = vmul.f32 %v125, %v181
    %v183 = vsel %vm118, %v180, 0.0
    %184 = vadd.xlane.f32.xlu0 %v183
    %v185 = vpop.xlane.xlu0 %184
    %v186 = vadd.f32 %v182, %v185
    %vm187 = vcmask 7168
    %188 = vst.msk [vmem:[#allocation3] sm:$0xff] %vm187, %v186
    %v189 = vld [vmem:[#allocation4] sm:$0xff]
    %v190 = vsel %vm116, %v104, 0.0
    %v191 = vsel %vm118, %v190, 0.0
    %192 = vadd.xlane.f32.xlu0 %v191
    %v193 = vpop.xlane.xlu0 %192
    %v194 = vadd.f32 %v189, %v193
    %195 = vst.msk [vmem:[#allocation4] sm:$0xff] %vm187, %v194
  $region33: #{tpu_custom_call.1} parent=0 // pred_fallthru
    _
  %vm196 = vcmask 7168
  %197 = vst.msk [vmem:[#allocation2] sm:$0xff] %vm196, %v122
  // Predicated region
  $region34: #{tpu_custom_call.1} parent=0 // pred_check
    %p198 = pneg %p20
  $region35: #{tpu_custom_call.1} parent=0 // pred_check_branch
    %200 = sbr.rel (%p198) target = $region37
  $region36: #{tpu_custom_call.1} parent=0 // pred_region
    %v201 = vld [vmem:[#allocation4] sm:$0xff]
    %v202 = vld [vmem:[%s4] sm:$0xff]
    %v203 = vrcp.pop %v202
    %v204 = vmul.f32 %v201, %v203
    %v205 = vld [vmem:[#allocation2] sm:$0xff]
    %v206 = vsub.f32 %v204, %v205
    %v207 = vld [vmem:[#allocation3] sm:$0xff]
    %v208 = vlog2.pop %v207
    %v209 = vmul.f32 %v208, 0.6931472
    %v210 = vsub.f32 %v206, %v209
    %v211 = vmul.f32 %v210, -1.0
    %212 = vst.msk [vmem:[%s5] sm:$0xff] %vm196, %v211
  $region37: #{tpu_custom_call.1} parent=0 // pred_fallthru
    _
  // Predicated region
  $region38: #{tpu_custom_call.1} parent=0 // pred_check
    _
  $region39: #{tpu_custom_call.1} parent=0 // pred_check_branch
    %214 = sbr.rel (0) target = $region41
  $region40: #{tpu_custom_call.1} parent=0 // pred_region
    _
  $region41: #{tpu_custom_call.1} parent=0 // pred_fallthru
    _
  // Predicated region
  $region42: #{tpu_custom_call.1} parent=0 // pred_check
    _
  $region43: #{tpu_custom_call.1} parent=0 // pred_check_branch
    %216 = sbr.rel (0) target = $region45
  $region44: #{tpu_custom_call.1} parent=0 // pred_region
    _
  $region45: #{tpu_custom_call.1} parent=0 // pred_fallthru
    _

</llo_original>
